<compile_context>
chip_gen: v7x
topology: tpu7x:2x2x1
jax: 0.10.0
libtpu: 0.0.40
codegen_flags: <defaults>
</compile_context>

<pallas_src>
import math

import jax
import jax.numpy as jnp
from jax.experimental import pallas as pl
from jax.experimental.pallas import tpu as pltpu

_LANE = 128


def _round_up(v, m):
    return ((v + m - 1) // m) * m


def _choose_blocks(B, N, itemsize):
    """Dtype-aware tile sizing for a (B, N) elementwise HBM-streaming kernel."""
    sub = 8 * max(1, 4 // itemsize)          # sublane packing: 8 f32, 16 bf16, 32 int8
    target = 2 << 20                         # ~2 MiB per tile per array

    # Lane (last) dim: 128-aligned unless N is smaller than one lane group.
    if N <= _LANE:
        block_n = N                          # full array dim -> always legal
    else:
        cap_n = max(_LANE, (target // (sub * itemsize)) // _LANE * _LANE)
        block_n = min((N // _LANE) * _LANE, cap_n)

    # Batch dim: sublane-aligned, grow until the tile reaches ~target bytes.
    if B <= sub:
        block_b = B                          # full array dim -> always legal
    else:
        rows = max(sub, (target // (block_n * itemsize)) // sub * sub)
        block_b = min((B // sub) * sub, rows)

    # Megacore: guarantee >= 2 parallel grid blocks for non-trivial tensors
    # so v7x's second TensorCore (and its DMA path) is not idle.
    if B * N * itemsize > (1 << 20) and pl.cdiv(B, block_b) * pl.cdiv(N, block_n) < 2:
        if B > sub:
            block_b = max(sub, _round_up(pl.cdiv(B, 2), sub))      # always < B here
        elif N > _LANE:
            block_n = max(_LANE, _round_up(pl.cdiv(N, 2), _LANE))  # always < N here

    return block_b, block_n


def _drop_path_kernel(x_ref, scale_ref, o_ref):
    """x_ref: (Bblk, Nblk); scale_ref: (Bblk, 1) f32 per-sample factor."""
    # Multiply in (at least) f32 — scale stays f32 — then cast the product back.
    o_ref[...] = (x_ref[...] * scale_ref[...]).astype(o_ref.dtype)


def drop_path(x, drop_prob=0.0, *, training=False, key=None, donate_x=False):
    """Stochastic depth on the batch (first) dim. x: (B, ...) any rank >= 1."""
    if drop_prob == 0.0 or not training:
        # Identity path — matches the PyTorch module exactly (no kernel needed).
        return x
    if key is None:
        raise ValueError("drop_path needs a PRNG key in training mode")

    keep_prob = 1.0 - drop_prob
    B = x.shape[0]
    N = int(math.prod(x.shape[1:])) if x.ndim > 1 else 1

    # Per-sample binary mask with the 1/keep_prob scaling folded in, kept in f32.
    # TODO(synk): jax.random stream is not bit-compatible with torch.rand.
    u = jax.random.uniform(key, (B,), dtype=jnp.float32)
    scale = (jnp.floor(keep_prob + u) / keep_prob).reshape(B, 1)   # f32, {0, 1/keep_prob}

    x2 = x.reshape(B, N)                                           # lane-dense view
    itemsize = jnp.dtype(x.dtype).itemsize
    block_b, block_n = _choose_blocks(B, N, itemsize)
    grid = (pl.cdiv(B, block_b), pl.cdiv(N, block_n))

    out = pl.pallas_call(
        _drop_path_kernel,
        out_shape=jax.ShapeDtypeStruct((B, N), x.dtype),
        grid_spec=pltpu.PrefetchScalarGridSpec(
            num_scalar_prefetch=0,
            grid=grid,
            in_specs=[
                pl.BlockSpec((block_b, block_n), lambda i, j: (i, j)),
                pl.BlockSpec((block_b, 1), lambda i, j: (i, 0)),
            ],
            out_specs=pl.BlockSpec((block_b, block_n), lambda i, j: (i, j)),
        ),
        compiler_params=pltpu.CompilerParams(
            dimension_semantics=("parallel", "parallel"),
            vmem_limit_bytes=32 << 20,
        ),
        cost_estimate=pl.CostEstimate(
            flops=B * N,
            transcendentals=0,
            bytes_accessed=2 * B * N * itemsize + B * 4,
        ),
        input_output_aliases=({0: 0} if donate_x else {}),
    )(x2, scale)

    return out.reshape(x.shape)


if __name__ == "__main__":
    drop_prob = 0.2
    keep_prob = 1.0 - drop_prob

    root = jax.random.PRNGKey(0)
    kx, kmask, kx2, kmask2, kx3, kmask3 = jax.random.split(root, 6)

    # --- small f32 NCHW, consistent with DropPath inside the MBConv blocks ---
    B, C, H, W = 2, 4, 16, 16
    x = jax.random.normal(kx, (B, C, H, W), jnp.float32)
    out = jax.block_until_ready(drop_path(x, drop_prob, training=True, key=kmask))
    assert out.shape == x.shape

    u = jax.random.uniform(kmask, (B,), dtype=jnp.float32)
    mask = jnp.floor(keep_prob + u)
    ref = x / keep_prob * mask.reshape(B, 1, 1, 1)
    err = jnp.max(jnp.abs(out - ref))
    assert jnp.allclose(out, ref, atol=1e-6, rtol=1e-6), f"max abs err {err}"

    # Each sample must be fully zeroed or scaled by exactly 1/keep_prob.
    flat, xf = out.reshape(B, -1), x.reshape(B, -1)
    for b in range(B):
        if mask[b] == 0.0:
            assert jnp.all(flat[b] == 0.0)
        else:
            assert jnp.allclose(flat[b], xf[b] / keep_prob, atol=1e-6, rtol=1e-6)

    # --- bf16, B > one sublane group (exercises 16-row packing + bigger tiles) ---
    B2 = 32
    xb = jax.random.normal(kx2, (B2, 8, 16, 16), jnp.float32).astype(jnp.bfloat16)
    out2 = jax.block_until_ready(drop_path(xb, drop_prob, training=True, key=kmask2))
    u2 = jax.random.uniform(kmask2, (B2,), dtype=jnp.float32)
    mask2 = jnp.floor(keep_prob + u2)
    ref2 = (xb.astype(jnp.float32) * (mask2 / keep_prob).reshape(B2, 1, 1, 1)).astype(jnp.bfloat16)
    assert jnp.allclose(out2.astype(jnp.float32), ref2.astype(jnp.float32),
                        atol=1e-2, rtol=1e-2)
    zeroed = (mask2 == 0.0).reshape(B2, 1)
    assert bool(jnp.all(jnp.where(zeroed, out2.reshape(B2, -1).astype(jnp.float32) == 0.0, True)))

    # --- ragged feature size: N = 300 (not a multiple of 128 -> partial edge block) ---
    B3 = 4
    xr = jax.random.normal(kx3, (B3, 3, 10, 10), jnp.float32)
    out3 = jax.block_until_ready(drop_path(xr, drop_prob, training=True, key=kmask3))
    u3 = jax.random.uniform(kmask3, (B3,), dtype=jnp.float32)
    mask3 = jnp.floor(keep_prob + u3)
    ref3 = xr / keep_prob * mask3.reshape(B3, 1, 1, 1)
    assert jnp.allclose(out3, ref3, atol=1e-6, rtol=1e-6)

    # --- eval mode (or drop_prob == 0): exact identity ---
    assert jnp.array_equal(drop_path(x, drop_prob, training=False), x)
    assert jnp.array_equal(drop_path(x, 0.0, training=True, key=kmask), x)

    print("KERNEL_OK")
</pallas_src>

<mosaic_0001>
module attributes {stable_mosaic.version = 11 : i64} {
  func.func @_drop_path_kernel(%arg0: i32, %arg1: i32, %arg2: memref<2x1024xf32, #tpu.memory_space<vmem>>, %arg3: memref<2x1xf32, #tpu.memory_space<vmem>>, %arg4: memref<2x1024xf32, #tpu.memory_space<vmem>>) attributes {dimension_semantics = [#tpu.dimension_semantics<parallel>, #tpu.dimension_semantics<parallel>], iteration_bounds = array<i64: 1, 1>, scalar_prefetch = 0 : i64, scratch_operands = 0 : i64, tpu.core_type = #tpu.core_type<tc>, window_params = [{transform_indices = @transform_0, window_bounds = array<i64: 2, 1024>}, {transform_indices = @transform_1, window_bounds = array<i64: 2, 1>}, {transform_indices = @transform_2, window_bounds = array<i64: 2, 1024>}]} {
    %c0 = arith.constant 0 : index
    %c0_0 = arith.constant 0 : index
    %0 = vector.load %arg2[%c0, %c0_0] : memref<2x1024xf32, #tpu.memory_space<vmem>>, vector<2x1024xf32>
    %c0_1 = arith.constant 0 : index
    %c0_2 = arith.constant 0 : index
    %1 = vector.load %arg3[%c0_1, %c0_2] : memref<2x1xf32, #tpu.memory_space<vmem>>, vector<2x1xf32>
    %2 = vector.broadcast %1 : vector<2x1xf32> to vector<2x1024xf32>
    %3 = arith.mulf %0, %2 : vector<2x1024xf32>
    %c0_3 = arith.constant 0 : index
    %c0_4 = arith.constant 0 : index
    %4 = vector.load %arg4[%c0_3, %c0_4] : memref<2x1024xf32, #tpu.memory_space<vmem>>, vector<2x1024xf32>
    tpu.vector_store %arg4[%c0_3, %c0_4], %3 {strides = array<i32>} : memref<2x1024xf32, #tpu.memory_space<vmem>>, vector<2x1024xf32>,
    return
  }
  func.func @transform_0(%arg0: i32, %arg1: i32) -> (i32, i32) {
    %c0_i32 = arith.constant 0 : i32
    return %arg0, %arg1 : i32, i32
  }
  func.func @transform_1(%arg0: i32, %arg1: i32) -> (i32, i32) {
    %c0_i32 = arith.constant 0 : i32
    %c0_i32_0 = arith.constant 0 : i32
    return %arg0, %c0_i32 : i32, i32
  }
  func.func @transform_2(%arg0: i32, %arg1: i32) -> (i32, i32) {
    %c0_i32 = arith.constant 0 : i32
    return %arg0, %arg1 : i32, i32
  }
}

</mosaic_0001>

<llo_original>
// kernel: tpu_custom_call.1
$region0: #{tpu_custom_call.1}
  #allocation0 [shape = 'u32[]', space=smem, size = 0x4, offset = 0x4, fixed_abs, tag = 'smem constant byte address 0x4 - core index']
  #allocation1 [shape = 'u32[144,128]{1,0:T(1,128)}', space=vmem, size = 0x12000, scoped, tag = 'internal scratch']
  %s0 = inlined_call_operand.hbm [shape: f32[2,1024], index: 0, kind: input, shape index: {}]
  %s1 = inlined_call_operand.vmem [shape: f32[2,1], index: 1, kind: input, shape index: {}]
  %s2 = inlined_call_operand.hbm [shape: f32[2,1024], index: 2, kind: output, shape index: {}]
  %s3 = sld [smem:[#allocation0]]
  $region22: #{tpu_custom_call.1} parent=0
    _
  %s5 = ssub.s32 1, %s3
  %s6 = scalar_select 0, %s5, %s3
  $region1: #{tpu_custom_call.1} parent=0
    #allocation2 [shape = 'u8[8192]{0}', space=vmem, size = 0x2000, scoped, tag = 'input window, operand 0, single buffered']
    #allocation3 [shape = 's32[1]{0}', space=sflag, size = 0x4, scoped, tag = 'scoped memory for tpu_custom_call.1']
    #allocation4 [shape = 's32[1]{0}', space=sflag, size = 0x4, scoped, tag = 'scoped memory for tpu_custom_call.1']
    #allocation5 [shape = 'u8[8192]{0}', space=vmem, size = 0x2000, scoped, tag = 'output window, operand 0, single buffered']
    %7 = vsyncpa [#allocation3], 0
    %8 = vsyncpa [#allocation4], 0
    // Predicated region
    $region2: #{tpu_custom_call.1} parent=1 // pred_check
      _
    $region3: #{tpu_custom_call.1} parent=1 // pred_check_branch
      %10 = sbr.rel (0) target = $region5
    $region4: #{tpu_custom_call.1} parent=1 // pred_region
      %s12 = ssub.s32 256, 256
      %13 = vsyncadd [#allocation3], %s12
      %s15 = sshll.u32 [#allocation2], 4
      %s16 = int_to_ptr.vmem [resolvable:$true] %s15
      %18 = dma.hbm_to_vmem [thread:$0]  %s0, 256, %s16, [#allocation3]
    $region5: #{tpu_custom_call.1} parent=1 // pred_fallthru
      _
    // Predicated region
    $region6: #{tpu_custom_call.1} parent=1 // pred_check
      _
    $region7: #{tpu_custom_call.1} parent=1 // pred_check_branch
      %20 = sbr.rel (0) target = $region9
    $region8: #{tpu_custom_call.1} parent=1 // pred_region
      _
    $region9: #{tpu_custom_call.1} parent=1 // pred_fallthru
      _
    // Predicated region
    $region10: #{tpu_custom_call.1} parent=1 // pred_check
      _
    $region11: #{tpu_custom_call.1} parent=1 // pred_check_branch
      %22 = sbr.rel (0) target = $region13
    $region12: #{tpu_custom_call.1} parent=1 // pred_region
      %23 = dma.done [#allocation3], 256
    $region13: #{tpu_custom_call.1} parent=1 // pred_fallthru
      _
    %v24 = vld [vmem:[#allocation2] sm:$0xff]
    %v25 = vld [vmem:[#allocation2 + $0x8] sm:$0xff]
    %v26 = vld [vmem:[%s1] sm:$0x3]
    %28 = vset.pattern.permute.xlu0 0
    %29 = vperm.xlu0 %28, %v26
    %v30 = vpop.permute.xlu0 %29
    %v32 = vunpack.c.l.s4 269488144
    %v33 = vunpack.c.0.s8 %v32
    %v34 = vlaneseq
    %v35 = vshrl.u32 %v34, 7
    %v36 = vsub.s32 %v33, %v35
    %v37 = vrot.slane %v30, %v36
    %v39 = vmul.f32 %v24, %v37
    %v40 = vmul.f32 %v25, %v37
    %41 = vst [vmem:[#allocation5] sm:$0xff] %v39
    %42 = vst [vmem:[#allocation5 + $0x8] sm:$0xff] %v40
    // Predicated region
    $region14: #{tpu_custom_call.1} parent=1 // pred_check
      _
    $region15: #{tpu_custom_call.1} parent=1 // pred_check_branch
      %44 = sbr.rel (0) target = $region17
    $region16: #{tpu_custom_call.1} parent=1 // pred_region
      %s46 = ssub.s32 256, 256
      %47 = vsyncadd [#allocation4], %s46
      %s49 = sshll.u32 [#allocation5], 4
      %s50 = int_to_ptr.vmem [resolvable:$true] %s49
      %52 = dma.vmem_to_hbm [thread:$0]  %s50, 256, %s2, [#allocation4]
    $region17: #{tpu_custom_call.1} parent=1 // pred_fallthru
      _
    // Predicated region
    $region18: #{tpu_custom_call.1} parent=1 // pred_check
      _
    $region19: #{tpu_custom_call.1} parent=1 // pred_check_branch
      %54 = sbr.rel (0) target = $region21
    $region20: #{tpu_custom_call.1} parent=1 // pred_region
      %55 = dma.done [#allocation4], 256
    $region21: #{tpu_custom_call.1} parent=1 // pred_fallthru
      _
    %56 = vsyncpa [#allocation3], 1
    %57 = vsyncpa [#allocation4], 1

</llo_original>
